<compile_context>
chip_gen: v5e
topology: v5e:2x2
jax: 0.10.0
libtpu: 0.0.40
codegen_flags: <defaults>
</compile_context>

<pallas_src>
import functools

import jax
import jax.numpy as jnp
import numpy as np
from jax.experimental import pallas as pl
from jax.experimental.pallas import tpu as pltpu


# ----------------------------------------------------------------------------
# Pallas kernels
# ----------------------------------------------------------------------------

def _mm_kernel(a_ref, b_ref, bias_ref, o_ref, acc_ref, *, activation):
    """Tiled (tm,tk)x(tk,tn) matmul; f32 accumulate; bias+activation epilogue."""
    @pl.when(pl.program_id(2) == 0)
    def _init():
        acc_ref[...] = jnp.zeros_like(acc_ref)

    acc_ref[...] += jnp.dot(a_ref[...], b_ref[...],
                            preferred_element_type=jnp.float32)

    @pl.when(pl.program_id(2) == pl.num_programs(2) - 1)
    def _epilogue():
        y = acc_ref[...] + bias_ref[...]            # (1, tn) broadcasts over rows
        if activation == "leaky_relu":
            y = jnp.where(y > 0, y, 0.2 * y)
        elif activation == "sigmoid":
            y = pl.reciprocal(1.0 + jnp.exp(-y), approx=True)   # EUP-only sigmoid
        elif activation == "tanh":
            y = jnp.tanh(y)
        o_ref[...] = y.astype(o_ref.dtype)


def _mm_sigmoid_blend_kernel(a_ref, b_ref, bias_ref, x_ref, bg_ref, o_ref, acc_ref):
    """Attention conv with fused BRM epilogue:
       o = sigmoid(A@B + bias) * x + (1 - sigmoid(.)) * bg."""
    @pl.when(pl.program_id(2) == 0)
    def _init():
        acc_ref[...] = jnp.zeros_like(acc_ref)

    acc_ref[...] += jnp.dot(a_ref[...], b_ref[...],
                            preferred_element_type=jnp.float32)

    @pl.when(pl.program_id(2) == pl.num_programs(2) - 1)
    def _epilogue():
        s = acc_ref[...] + bias_ref[...]
        atten = pl.reciprocal(1.0 + jnp.exp(-s), approx=True)
        xv = x_ref[...].astype(jnp.float32)
        bgv = bg_ref[...].astype(jnp.float32)
        o_ref[...] = (atten * xv + (1.0 - atten) * bgv).astype(o_ref.dtype)


def _instnorm_lrelu_kernel(x_ref, o_ref):
    """InstanceNorm2d(eps=0.8, no affine) + LeakyReLU(0.2) on a (1, H*W, C) block.
    Variance from centered squares (no E[x^2]-mu^2 cancellation)."""
    x = x_ref[...].astype(jnp.float32)              # (1, S, C)
    mu = jnp.mean(x, axis=1, keepdims=True)
    xc = x - mu
    var = jnp.mean(xc * xc, axis=1, keepdims=True)
    y = xc * jax.lax.rsqrt(var + 0.8)
    o_ref[...] = jnp.where(y > 0, y, 0.2 * y).astype(o_ref.dtype)


# ----------------------------------------------------------------------------
# Pallas call wrappers
# ----------------------------------------------------------------------------

def _round_up(x, m):
    return ((x + m - 1) // m) * m


def _pick_tm(M):
    # Prefer >= 2 grid points along M so megacore (v7x: 2 TCs) has parallel work.
    for t in (256, 128):
        if M % t == 0 and M // t >= 2:
            return t, M
    for t in (512, 256, 128):
        if M % t == 0:
            return t, M
    if M < 128:
        tm = _round_up(max(M, 8), 8)
        return tm, tm
    return 128, _round_up(M, 128)          # pad M only when we really must


def _pick_tk(K):
    if K <= 2048:                          # small K: keep whole, no K padding
        return K, K
    for t in (1024, 512, 256):
        if K % t == 0:
            return t, K
    return 512, _round_up(K, 512)


def pallas_matmul(a, b, bias=None, activation=None, blend=None,
                  out_dtype=jnp.bfloat16):
    """a:(M,K) @ b:(K,N) with fused bias/activation (or BRM blend) epilogue.

    * A/B cast to bf16 for the MXU, f32 accumulation in a VMEM scratch
    * N padded to a multiple of 128 -> lane-dense, unmasked stores
    * grid=(M/tm, N/tn, K/tk), ("parallel","parallel","arbitrary")
    """
    M, K = a.shape
    Kb, N = b.shape
    assert K == Kb

    Np = _round_up(N, 128)
    tn = next(t for t in (512, 256, 128) if Np % t == 0)
    tm, Mp = _pick_tm(M)
    tk, Kp = _pick_tk(K)

    a16 = a.astype(jnp.bfloat16)
    b16 = b.astype(jnp.bfloat16)
    if Mp != M or Kp != K:
        a16 = jnp.pad(a16, ((0, Mp - M), (0, Kp - K)))
    if Kp != K or Np != N:
        b16 = jnp.pad(b16, ((0, Kp - K), (0, Np - N)))

    if bias is None:
        bias2 = jnp.zeros((1, Np), jnp.float32)
    else:
        bias2 = jnp.pad(bias.astype(jnp.float32).reshape(1, N),
                        ((0, 0), (0, Np - N)))

    in_specs = [
        pl.BlockSpec((tm, tk), lambda i, j, k: (i, k)),
        pl.BlockSpec((tk, tn), lambda i, j, k: (k, j)),
        pl.BlockSpec((1, tn), lambda i, j, k: (0, j)),
    ]
    operands = [a16, b16, bias2]

    if blend is None:
        kernel = functools.partial(_mm_kernel, activation=activation)
    else:
        def _pad_mn(t):
            t = t.astype(jnp.bfloat16)
            if (Mp, Np) != (M, N):
                t = jnp.pad(t, ((0, Mp - M), (0, Np - N)))
            return t
        operands += [_pad_mn(blend[0]), _pad_mn(blend[1])]
        in_specs += [pl.BlockSpec((tm, tn), lambda i, j, k: (i, j)),
                     pl.BlockSpec((tm, tn), lambda i, j, k: (i, j))]
        kernel = _mm_sigmoid_blend_kernel

    out = pl.pallas_call(
        kernel,
        out_shape=jax.ShapeDtypeStruct((Mp, Np), out_dtype),
        grid_spec=pltpu.PrefetchScalarGridSpec(
            num_scalar_prefetch=0,
            grid=(Mp // tm, Np // tn, Kp // tk),
            in_specs=in_specs,
            out_specs=pl.BlockSpec((tm, tn), lambda i, j, k: (i, j)),
            scratch_shapes=[pltpu.VMEM((tm, tn), jnp.float32)],
        ),
        compiler_params=pltpu.CompilerParams(
            dimension_semantics=("parallel", "parallel", "arbitrary"),
            vmem_limit_bytes=32 * 1024 * 1024,     # fits v7x's 64 MiB with headroom
        ),
    )(*operands)

    if (Mp, Np) != (M, N):
        out = out[:M, :N]
    return out


def instnorm_lrelu(x):
    """x: NHWC -> InstanceNorm2d(eps=0.8, no affine) + LeakyReLU(0.2), gridded over B."""
    B, H, W, C = x.shape
    S = H * W
    xr = x.reshape(B, S, C)
    out = pl.pallas_call(
        _instnorm_lrelu_kernel,
        out_shape=jax.ShapeDtypeStruct((B, S, C), x.dtype),
        grid=(B,),
        in_specs=[pl.BlockSpec((1, S, C), lambda b: (b, 0, 0))],
        out_specs=pl.BlockSpec((1, S, C), lambda b: (b, 0, 0)),
        compiler_params=pltpu.CompilerParams(dimension_semantics=("parallel",)),
    )(xr)
    return out.reshape(B, H, W, C)


# ----------------------------------------------------------------------------
# Layout glue (im2col gathers, tiny avg-pool, NCHW<->NHWC at the boundary)
# ----------------------------------------------------------------------------

def _im2col_3x3(x):
    """NHWC 3x3 / stride 1 / pad 1 im2col -> (B*H*W, 9*C)."""
    B, H, W, C = x.shape
    xp = jnp.pad(x, ((0, 0), (1, 1), (1, 1), (0, 0)))
    cols = []
    for kh in range(3):
        for kw in range(3):
            cols.append(xp[:, kh:kh + H, kw:kw + W, :])
    cols = jnp.stack(cols, axis=3)                    # (B, H, W, 9, C)
    return cols.reshape(B * H * W, 9 * C)


def _im2col_up2_3x3(x):
    """im2col for [Upsample(2x nearest) -> Conv3x3 s1 p1] with the upsample folded
    into the gather indices: the 4x-larger upsampled tensor is never materialized."""
    B, Hin, Win, C = x.shape
    Ho, Wo = 2 * Hin, 2 * Win
    xp = jnp.pad(x, ((0, 0), (1, 1), (1, 1), (0, 0)))
    cols = []
    for kh in range(3):
        ridx = 1 + (np.arange(Ho) + kh - 1) // 2      # static (floor-div) indices
        for kw in range(3):
            cidx = 1 + (np.arange(Wo) + kw - 1) // 2
            cols.append(xp[:, ridx][:, :, cidx])      # (B, Ho, Wo, C)
    cols = jnp.stack(cols, axis=3)                    # (B, Ho, Wo, 9, C)
    return cols.reshape(B * Ho * Wo, 9 * C), Ho, Wo


def _w3x3_to_mat(w):
    """PyTorch (Cout, Cin, 3, 3) -> (9*Cin, Cout), matching the im2col column order."""
    Cout, Cin = w.shape[0], w.shape[1]
    return jnp.transpose(w, (2, 3, 1, 0)).reshape(9 * Cin, Cout)


def conv3x3_upsample2(x, w):
    """nn.Upsample(2) + nn.Conv2d(inc, outc, 3, 1, 1, bias=False), NHWC."""
    B = x.shape[0]
    cols, Ho, Wo = _im2col_up2_3x3(x)
    out = pallas_matmul(cols, _w3x3_to_mat(w), bias=None, activation=None,
                        out_dtype=jnp.bfloat16)
    return out.reshape(B, Ho, Wo, w.shape[0])


def conv1x1(x, w, b):
    """nn.Conv2d(cin, cout, 1, 1, 0), NHWC."""
    B, H, W, Cin = x.shape
    Cout = w.shape[0]
    a = x.reshape(B * H * W, Cin)
    w2 = jnp.transpose(w.reshape(Cout, Cin))
    out = pallas_matmul(a, w2, bias=b, activation=None, out_dtype=jnp.bfloat16)
    return out.reshape(B, H, W, Cout)


def brm_attention_blend(m_ds, w, b, feat, bg_ds):
    """BRM: sigmoid(Conv3x3(mask_ds)) blended with feat/bg inside the matmul epilogue."""
    B, H, W, _ = m_ds.shape
    Cout = w.shape[0]
    M = B * H * W
    cols = _im2col_3x3(m_ds)
    out = pallas_matmul(cols, _w3x3_to_mat(w), bias=b,
                        blend=(feat.reshape(M, Cout), bg_ds.reshape(M, Cout)),
                        out_dtype=jnp.float32)
    return out.reshape(B, H, W, Cout)


def avg_pool_nhwc(x, ks):
    if ks == 1:
        return x
    B, H, W, C = x.shape
    return x.reshape(B, H // ks, ks, W // ks, ks, C).mean(axis=(2, 4))


# ----------------------------------------------------------------------------
# maskUup forward (mirrors the PyTorch module; NCHW in / NCHW out)
# ----------------------------------------------------------------------------

def mask_uup_forward(p, bg, x, skip_input, z, mask):
    del z  # noise=False -> insert_noise is None; z never used in forward
    bg_h = jnp.transpose(bg, (0, 2, 3, 1))
    x_h = jnp.transpose(x, (0, 2, 3, 1)).astype(jnp.bfloat16)
    mask_h = jnp.transpose(mask, (0, 2, 3, 1))
    skip_h = jnp.transpose(skip_input, (0, 2, 3, 1)).astype(jnp.float32)

    # self.model: Upsample(2) -> Conv3x3(no bias) -> InstanceNorm(0.8) -> LeakyReLU(0.2)
    feat = conv3x3_upsample2(x_h, p["conv_w"])
    feat = instnorm_lrelu(feat)

    if p["mask"]:
        ks = p["ks"]
        m_ds = avg_pool_nhwc(mask_h, ks).astype(jnp.bfloat16)   # AvgPool2d(ks, ks)
        bg_ds = bg_h[:, ::ks, ::ks, :].astype(jnp.bfloat16)     # Upsample(1/ks) nearest
        if "use1x1_w" in p:                                     # channels != outc
            bg_ds = conv1x1(bg_ds, p["use1x1_w"], p["use1x1_b"])
        feat = brm_attention_blend(m_ds, p["m_w"], p["m_b"], feat, bg_ds)
    else:
        feat = feat.astype(jnp.float32)

    # TODO(synk): insert_noise path (noise=True) not implemented; module default is noise=False.
    out = jnp.concatenate([feat, skip_h], axis=-1)              # torch.cat(dim=1) in NCHW
    return jnp.transpose(out, (0, 3, 1, 2))


# ----------------------------------------------------------------------------
# Deterministic parameter initialization (shapes from maskUup/BRM.__init__)
# ----------------------------------------------------------------------------

def init_params(key, img_shape, inc, outc, ks, mask=True):
    c, _, _ = img_shape
    keys = iter(jax.random.split(key, 8))
    nk = lambda: next(keys)
    p = {
        "mask": mask,
        "ks": ks,
        # nn.Conv2d(inc, outc, 3, 1, 1, bias=False)
        "conv_w": jax.random.normal(nk(), (outc, inc, 3, 3), jnp.float32) * 0.05,
    }
    if mask:
        # BRM.m: nn.Conv2d(channels, outc, 3, 1, 1) (+ sigmoid)
        p["m_w"] = jax.random.normal(nk(), (outc, c, 3, 3), jnp.float32) * 0.05
        p["m_b"] = jax.random.normal(nk(), (outc,), jnp.float32) * 0.05
        if c != outc:
            # BRM.use1x1: nn.Conv2d(channels, outc, 1, 1, 0)
            p["use1x1_w"] = jax.random.normal(nk(), (outc, c, 1, 1), jnp.float32) * 0.05
            p["use1x1_b"] = jax.random.normal(nk(), (outc,), jnp.float32) * 0.05
    return p


# ----------------------------------------------------------------------------

if __name__ == "__main__":
    B = 2
    c, H, W = 4, 32, 32              # img_shape: full-resolution bg / mask
    inc, outc, ks = 32, 16, 2
    skip_c = 16
    Hf, Wf = H // ks, W // ks        # feature resolution produced by this block

    key = jax.random.PRNGKey(0)
    kp, kx, kbg, ksk, kz, km = jax.random.split(key, 6)
    params = init_params(kp, (c, H, W), inc, outc, ks)

    x = jax.random.normal(kx, (B, inc, Hf // 2, Wf // 2), jnp.float32)
    bg = jax.random.normal(kbg, (B, c, H, W), jnp.float32)
    skip_input = jax.random.normal(ksk, (B, skip_c, Hf, Wf), jnp.float32)
    z = jax.random.normal(kz, (B, 6), jnp.float32)
    mask = (jax.random.uniform(km, (B, c, H, W)) > 0.5).astype(jnp.float32)

    out = mask_uup_forward(params, bg, x, skip_input, z, mask)
    out = jax.block_until_ready(out)

    assert out.shape == (B, outc + skip_c, Hf, Wf)
    assert bool(jnp.all(jnp.isfinite(out)))
    print("KERNEL_OK")
</pallas_src>

<mosaic_0001>
module attributes {stable_mosaic.version = 11 : i64} {
  func.func @_mm_kernel(%arg0: i32, %arg1: i32, %arg2: i32, %arg3: memref<256x288xbf16, #tpu.memory_space<vmem>>, %arg4: memref<288x128xbf16, #tpu.memory_space<vmem>>, %arg5: memref<1x128xf32, #tpu.memory_space<vmem>>, %arg6: memref<256x128xbf16, #tpu.memory_space<vmem>>, %arg7: memref<256x128xf32, #tpu.memory_space<vmem>>) attributes {dimension_semantics = [#tpu.dimension_semantics<parallel>, #tpu.dimension_semantics<parallel>, #tpu.dimension_semantics<arbitrary>], iteration_bounds = array<i64: 2, 1, 1>, scalar_prefetch = 0 : i64, scratch_operands = 1 : i64, tpu.core_type = #tpu.core_type<tc>, window_params = [{transform_indices = @transform_0, window_bounds = array<i64: 256, 288>}, {transform_indices = @transform_1, window_bounds = array<i64: 288, 128>}, {transform_indices = @transform_2, window_bounds = array<i64: 1, 128>}, {transform_indices = @transform_3, window_bounds = array<i64: 256, 128>}]} {
    %c0_i32 = arith.constant 0 : i32
    %0 = arith.cmpi eq, %arg2, %c0_i32 : i32
    %1 = arith.extui %0 : i1 to i32
    %c0_i32_0 = arith.constant 0 : i32
    %2 = arith.cmpi ne, %1, %c0_i32_0 : i32
    scf.if %2 {
      %cst_10 = arith.constant 0.000000e+00 : f32
      %12 = vector.broadcast %cst_10 : f32 to vector<256x128xf32>
      %c0_11 = arith.constant 0 : index
      %c0_12 = arith.constant 0 : index
      %13 = vector.load %arg7[%c0_11, %c0_12] : memref<256x128xf32, #tpu.memory_space<vmem>>, vector<256x128xf32>
      tpu.vector_store %arg7[%c0_11, %c0_12], %12 {strides = array<i32>} : memref<256x128xf32, #tpu.memory_space<vmem>>, vector<256x128xf32>,
    } else {
    }
    %c0 = arith.constant 0 : index
    %c0_1 = arith.constant 0 : index
    %3 = vector.load %arg7[%c0, %c0_1] : memref<256x128xf32, #tpu.memory_space<vmem>>, vector<256x128xf32>
    %c0_2 = arith.constant 0 : index
    %c0_3 = arith.constant 0 : index
    %4 = vector.load %arg3[%c0_2, %c0_3] : memref<256x288xbf16, #tpu.memory_space<vmem>>, vector<256x288xbf16>
    %c0_4 = arith.constant 0 : index
    %c0_5 = arith.constant 0 : index
    %5 = vector.load %arg4[%c0_4, %c0_5] : memref<288x128xbf16, #tpu.memory_space<vmem>>, vector<288x128xbf16>
    %cst = arith.constant dense<0.000000e+00> : vector<256x128xf32>
    %6 = tpu.matmul %4, %5, %cst {dimension_numbers = #tpu.dot_dimension_numbers<[1], [0], [0], [1], [0, 0, 1, 1], [], []>} : vector<256x288xbf16>, vector<288x128xbf16>, vector<256x128xf32> -> vector<256x128xf32>
    %7 = arith.addf %3, %6 : vector<256x128xf32>
    %c0_6 = arith.constant 0 : index
    %c0_7 = arith.constant 0 : index
    %8 = vector.load %arg7[%c0_6, %c0_7] : memref<256x128xf32, #tpu.memory_space<vmem>>, vector<256x128xf32>
    tpu.vector_store %arg7[%c0_6, %c0_7], %7 {strides = array<i32>} : memref<256x128xf32, #tpu.memory_space<vmem>>, vector<256x128xf32>,
    %c0_i32_8 = arith.constant 0 : i32
    %9 = arith.cmpi eq, %arg2, %c0_i32_8 : i32
    %10 = arith.extui %9 : i1 to i32
    %c0_i32_9 = arith.constant 0 : i32
    %11 = arith.cmpi ne, %10, %c0_i32_9 : i32
    scf.if %11 {
      %c0_10 = arith.constant 0 : index
      %c0_11 = arith.constant 0 : index
      %12 = vector.load %arg7[%c0_10, %c0_11] : memref<256x128xf32, #tpu.memory_space<vmem>>, vector<256x128xf32>
      %c0_12 = arith.constant 0 : index
      %c0_13 = arith.constant 0 : index
      %13 = vector.load %arg5[%c0_12, %c0_13] : memref<1x128xf32, #tpu.memory_space<vmem>>, vector<1x128xf32>
      %14 = vector.broadcast %13 : vector<1x128xf32> to vector<256x128xf32>
      %15 = arith.addf %12, %14 : vector<256x128xf32>
      %16 = arith.truncf %15 : vector<256x128xf32> to vector<256x128xbf16>
      %c0_14 = arith.constant 0 : index
      %c0_15 = arith.constant 0 : index
      %17 = vector.load %arg6[%c0_14, %c0_15] : memref<256x128xbf16, #tpu.memory_space<vmem>>, vector<256x128xbf16>
      tpu.vector_store %arg6[%c0_14, %c0_15], %16 {strides = array<i32>} : memref<256x128xbf16, #tpu.memory_space<vmem>>, vector<256x128xbf16>,
    } else {
    }
    return
  }
  func.func @transform_0(%arg0: i32, %arg1: i32, %arg2: i32) -> (i32, i32) {
    %c0_i32 = arith.constant 0 : i32
    return %arg0, %arg2 : i32, i32
  }
  func.func @transform_1(%arg0: i32, %arg1: i32, %arg2: i32) -> (i32, i32) {
    %c0_i32 = arith.constant 0 : i32
    return %arg2, %arg1 : i32, i32
  }
  func.func @transform_2(%arg0: i32, %arg1: i32, %arg2: i32) -> (i32, i32) {
    %c0_i32 = arith.constant 0 : i32
    %c0_i32_0 = arith.constant 0 : i32
    return %c0_i32, %arg1 : i32, i32
  }
  func.func @transform_3(%arg0: i32, %arg1: i32, %arg2: i32) -> (i32, i32) {
    %c0_i32 = arith.constant 0 : i32
    return %arg0, %arg1 : i32, i32
  }
}

</mosaic_0001>

<llo_original>
// kernel: tpu_custom_call.1
$region0: #{tpu_custom_call.1}
  #allocation0 [shape = 'u32[]', space=smem, size = 0x4, offset = 0x4, fixed_abs, tag = 'smem constant byte address 0x4 - core index']
  #allocation1 [shape = 'u32[72,128]{1,0:T(1,128)}', space=vmem, size = 0x9000, scoped, tag = 'internal scratch']
  #allocation2 [shape = 'f32[256,128]{1,0:T(8,128)}', space=vmem, size = 0x20000, scoped, tag = 'scratch operand']
  %s0 = inlined_call_operand.vmem [shape: bf16[512,288], index: 0, kind: input, shape index: {}]
  %s1 = inlined_call_operand.vmem [shape: bf16[288,128], index: 1, kind: input, shape index: {}]
  %s2 = inlined_call_operand.vmem [shape: f32[1,128], index: 2, kind: input, shape index: {}]
  %s3 = inlined_call_operand.hbm [shape: bf16[512,128], index: 3, kind: output, shape index: {}]
  %s4 = sld [smem:[#allocation0]]
  $region53: #{tpu_custom_call.1} parent=0
    _
  %s6 = ssub.s32 1, %s4
  %s7 = scalar_select 0, %s6, %s4
  $region1: #{tpu_custom_call.1} parent=0
    #allocation3 [shape = 'u8[131072]{0}', space=vmem, size = 0x20000, scoped, tag = 'output window, operand 0']
    #allocation4 [shape = 's32[2]{0}', space=sflag, size = 0x8, scoped, tag = 'scoped memory for tpu_custom_call.1']
    %8 = vsyncpa [#allocation4], 0
    %s9 = scalar_lea.sflag [#allocation4], 1
    %10 = vsyncpa %s9, 0
    loop: start=0, step=1, limit=4
    $region2: #{tpu_custom_call.1} parent=1 // loop_pre_header
      _
    $region3: #{tpu_custom_call.1} parent=1 // loop_header
      %s12 = sphi 0, %s16
      %p13 = scmp.ge.s32.totalorder %s12, 4
      %s19 = sphi 0, %s38
      %s20 = sphi 0, %s34
      %s21 = sphi 0, %s30
      %s22 = sphi 0, %s19
      %s23 = sphi 0, %s20
      %s24 = sphi 0, %s21
      %s25 = sphi 0, %s22
      %s26 = sphi 0, %s23
      %s27 = sphi 0, %s24
      %s43 = sphi 0, %s45
      %s46 = sphi 0, %s43
      %s47 = sphi 0, %s46
      %s63 = sphi 0, %s47
      %s71 = sphi 0, %s73
      %s74 = sphi 0, %s71
      %s75 = sphi 0, %s74
      %s91 = sphi 0, %s75
      %s97 = sphi 0, %s99
      %s100 = sphi 0, %s97
      %s101 = sphi 0, %s100
      %s117 = sphi 0, %s101
      %s125 = sphi 0, %s127
      %s128 = sphi 0, %s125
      %s129 = sphi 0, %s128
      %s145 = sphi 0, %s129
    $region4: #{tpu_custom_call.1} parent=1 // loop_header_branch
      %15 = sbr.rel (%p13) target = $region8
    $region5: #{tpu_custom_call.1} parent=1 // loop_body
      %s17 = ssub.s32 %s12, 1
      %s18 = ssub.s32 %s12, 2
      %s28 = sadd.s32 1, %s21
      %p29 = scmp.ge.s32.totalorder %s28, 1
      %s30 = scalar_select %p29, 0, %s28
      %s31 = sadd.s32 1, %s20
      %s32 = scalar_select %p29, %s31, %s20
      %p33 = scmp.ge.s32.totalorder %s32, 1
      %s34 = scalar_select %p33, 0, %s32
      %s35 = sadd.s32 1, %s19
      %s36 = scalar_select %p33, %s35, %s19
      %p37 = scmp.ge.s32.totalorder %s36, 2
      %s38 = scalar_select %p37, 0, %s36
      %s39 = ssub.s32 %s19, %s38
      %s40 = ssub.s32 %s21, %s30
      %s41 = sor.u32 %s39, %s40
      %p42 = scmp.eq.s32.totalorder %s41, 0
      %s44 = sadd.s32 %s43, 1
      %s45 = scalar_select %p42, %s43, %s44
      %p48 = pneg %p42
      %p49 = scmp.eq.s32.totalorder %s12, 1
      %p50 = por %p48, %p49
      %p51 = scmp.ne.s32.totalorder %s43, %s46
      %p52 = scmp.eq.s32.totalorder %s12, 0
      %p53 = por %p51, %p52
      %p54 = scmp.ne.s32.totalorder %s43, %s46
      %p55 = scmp.eq.s32.totalorder %s17, 1
      %p56 = por %p54, %p55
      %p57 = scmp.ne.s32.totalorder %s46, %s47
      %p58 = scmp.eq.s32.totalorder %s17, 0
      %p59 = por %p57, %p58
      %p60 = scmp.ne.s32.totalorder %s46, %s47
      %p61 = scmp.eq.s32.totalorder %s18, 1
      %p62 = por %p60, %p61
      %p64 = scmp.ne.s32.totalorder %s47, %s63
      %p65 = scmp.eq.s32.totalorder %s18, 0
      %p66 = por %p64, %p65
      %s67 = ssub.s32 %s21, %s30
      %s68 = ssub.s32 %s20, %s34
      %s69 = sor.u32 %s67, %s68
      %p70 = scmp.eq.s32.totalorder %s69, 0
      %s72 = sadd.s32 %s71, 1
      %s73 = scalar_select %p70, %s71, %s72
      %p76 = pneg %p70
      %p77 = scmp.eq.s32.totalorder %s12, 1
      %p78 = por %p76, %p77
      %p79 = scmp.ne.s32.totalorder %s71, %s74
      %p80 = scmp.eq.s32.totalorder %s12, 0
      %p81 = por %p79, %p80
      %p82 = scmp.ne.s32.totalorder %s71, %s74
      %p83 = scmp.eq.s32.totalorder %s17, 1
      %p84 = por %p82, %p83
      %p85 = scmp.ne.s32.totalorder %s74, %s75
      %p86 = scmp.eq.s32.totalorder %s17, 0
      %p87 = por %p85, %p86
      %p88 = scmp.ne.s32.totalorder %s74, %s75
      %p89 = scmp.eq.s32.totalorder %s18, 1
      %p90 = por %p88, %p89
      %p92 = scmp.ne.s32.totalorder %s75, %s91
      %p93 = scmp.eq.s32.totalorder %s18, 0
      %p94 = por %p92, %p93
      %s95 = ssub.s32 %s20, %s34
      %p96 = scmp.eq.s32.totalorder %s95, 0
      %s98 = sadd.s32 %s97, 1
      %s99 = scalar_select %p96, %s97, %s98
      %p102 = pneg %p96
      %p103 = scmp.eq.s32.totalorder %s12, 1
      %p104 = por %p102, %p103
      %p105 = scmp.ne.s32.totalorder %s97, %s100
      %p106 = scmp.eq.s32.totalorder %s12, 0
      %p107 = por %p105, %p106
      %p108 = scmp.ne.s32.totalorder %s97, %s100
      %p109 = scmp.eq.s32.totalorder %s17, 1
      %p110 = por %p108, %p109
      %p111 = scmp.ne.s32.totalorder %s100, %s101
      %p112 = scmp.eq.s32.totalorder %s17, 0
      %p113 = por %p111, %p112
      %p114 = scmp.ne.s32.totalorder %s100, %s101
      %p115 = scmp.eq.s32.totalorder %s18, 1
      %p116 = por %p114, %p115
      %p118 = scmp.ne.s32.totalorder %s101, %s117
      %p119 = scmp.eq.s32.totalorder %s18, 0
      %p120 = por %p118, %p119
      %s121 = ssub.s32 %s19, %s38
      %s122 = ssub.s32 %s20, %s34
      %s123 = sor.u32 %s121, %s122
      %p124 = scmp.eq.s32.totalorder %s123, 0
      %s126 = sadd.s32 %s125, 1
      %s127 = scalar_select %p124, %s125, %s126
      %p130 = pneg %p124
      %p131 = scmp.eq.s32.totalorder %s12, 1
      %p132 = por %p130, %p131
      %p133 = scmp.ne.s32.totalorder %s125, %s128
      %p134 = scmp.eq.s32.totalorder %s12, 0
      %p135 = por %p133, %p134
      %p136 = scmp.ne.s32.totalorder %s125, %s128
      %p137 = scmp.eq.s32.totalorder %s17, 1
      %p138 = por %p136, %p137
      %p139 = scmp.ne.s32.totalorder %s128, %s129
      %p140 = scmp.eq.s32.totalorder %s17, 0
      %p141 = por %p139, %p140
      %p142 = scmp.ne.s32.totalorder %s128, %s129
      %p143 = scmp.eq.s32.totalorder %s18, 1
      %p144 = por %p142, %p143
      %p146 = scmp.ne.s32.totalorder %s129, %s145
      %p147 = scmp.eq.s32.totalorder %s18, 0
      %p148 = por %p146, %p147
      %p149 = scmp.le.s32.totalorder 1, %s12
      %p150 = scmp.lt.s32.totalorder %s12, 3
      %p151 = pnand %p149, %p150
      %p152 = pneg %p151
      // Predicated region
      $region9: #{tpu_custom_call.1} parent=5 // pred_check
        _
      $region10: #{tpu_custom_call.1} parent=5 // pred_check_branch
        %154 = sbr.rel (%p151) target = $region12
      $region11: #{tpu_custom_call.1} parent=5 // pred_region
        %s155 = ssub.s32 %s12, 1
        // Predicated region
        $region13: #{tpu_custom_call.1} parent=11 // pred_check
          %p156 = pneg %p87
        $region14: #{tpu_custom_call.1} parent=11 // pred_check_branch
          %158 = sbr.rel (%p156) target = $region16
        $region15: #{tpu_custom_call.1} parent=11 // pred_region
          %s159 = smul.u32 36, %s24
          %p160 = scmp.lt.s32.totalorder %s159, 35
          %s161 = scalar_select %p160, %s159, 35
          %p162 = scmp.lt.s32.totalorder %s23, 0
          %s163 = scalar_select %p162, %s23, 0
          %s164 = sadd.s32 %s163, %s161
          %s165 = smul.addr %s164, 4
          %s166 = scalar_lea.vmem %s1, %s165
          %s167 = smul.u32 36, %s24
        $region16: #{tpu_custom_call.1} parent=11 // pred_fallthru
          _
        // Predicated region
        $region17: #{tpu_custom_call.1} parent=11 // pred_check
          %p168 = pneg %p113
        $region18: #{tpu_custom_call.1} parent=11 // pred_check_branch
          %170 = sbr.rel (%p168) target = $region20
        $region19: #{tpu_custom_call.1} parent=11 // pred_region
          %p171 = scmp.lt.s32.totalorder %s23, 0
          %s172 = scalar_select %p171, %s23, 0
          %s173 = scalar_lea.vmem %s2, %s172
        $region20: #{tpu_custom_call.1} parent=11 // pred_fallthru
          _
      $region12: #{tpu_custom_call.1} parent=5 // pred_fallthru
        _
      %p174 = scmp.lt.s32.totalorder %s12, 2
      // Predicated region
      $region21: #{tpu_custom_call.1} parent=5 // pred_check
        %p175 = pneg %p174
      $region22: #{tpu_custom_call.1} parent=5 // pred_check_branch
        %177 = sbr.rel (%p175) target = $region24
      $region23: #{tpu_custom_call.1} parent=5 // pred_region
        // Predicated region
        $region25: #{tpu_custom_call.1} parent=23 // pred_check
          %p178 = pneg %p53
        $region26: #{tpu_custom_call.1} parent=23 // pred_check_branch
          %180 = sbr.rel (%p178) target = $region28
        $region27: #{tpu_custom_call.1} parent=23 // pred_region
          %s181 = smul.u32 32, %s19
          %s182 = smul.u32 3, %s21
          %p183 = scmp.lt.s32.totalorder %s181, 63
          %s184 = scalar_select %p183, %s181, 63
          %p185 = scmp.lt.s32.totalorder %s182, 2
          %s186 = scalar_select %p185, %s182, 2
          %s187 = smul.addr %s184, 3
          %s188 = sadd.s32 %s186, %s187
          %s189 = smul.addr %s188, 4
          %s190 = scalar_lea.vmem %s0, %s189
          %s191 = smul.u32 32, %s19
          %s192 = smul.u32 3, %s21
        $region28: #{tpu_custom_call.1} parent=23 // pred_fallthru
          _
      $region24: #{tpu_custom_call.1} parent=5 // pred_fallthru
        _
      %p193 = scmp.le.s32.totalorder 1, %s12
      %p194 = scmp.lt.s32.totalorder %s12, 3
      %p195 = pnand %p193, %p194
      %p196 = pneg %p195
      // Predicated region
      $region29: #{tpu_custom_call.1} parent=5 // pred_check
        _
      $region30: #{tpu_custom_call.1} parent=5 // pred_check_branch
        %198 = sbr.rel (%p195) target = $region32
      $region31: #{tpu_custom_call.1} parent=5 // pred_region
        %s199 = ssub.s32 %s12, 1
        %s200 = smul.u32 32, %s22
        %s201 = smul.u32 3, %s24
        %p202 = scmp.lt.s32.totalorder %s200, 63
        %s203 = scalar_select %p202, %s200, 63
        %p204 = scmp.lt.s32.totalorder %s201, 2
        %s205 = scalar_select %p204, %s201, 2
        %s206 = smul.addr %s203, 3
        %s207 = sadd.s32 %s205, %s206
        %s208 = smul.addr %s207, 4
        %s209 = scalar_lea.vmem %s0, %s208
        %p210 = pneg %p59
        %p211 = pneg %p56
        %s212 = smul.u32 36, %s24
        %p213 = scmp.lt.s32.totalorder %s212, 35
        %s214 = scalar_select %p213, %s212, 35
        %p215 = scmp.lt.s32.totalorder %s23, 0
        %s216 = scalar_select %p215, %s23, 0
        %s217 = sadd.s32 %s216, %s214
        %s218 = smul.addr %s217, 4
        %s219 = scalar_lea.vmem %s1, %s218
        %p220 = pneg %p87
        %p221 = pneg %p84
        %p222 = scmp.lt.s32.totalorder %s23, 0
        %s223 = scalar_select %p222, %s23, 0
        %s224 = scalar_lea.vmem %s2, %s223
        %p225 = pneg %p113
        %p226 = pneg %p110
        %p227 = pneg %p141
        %p228 = pneg %p138
        %s229 = sand.u32 %s128, 1
        %s230 = scalar_lea.sflag [#allocation4], %s229
        %s231 = sand.u32 %s128, 1
        %s232 = smul.addr %s231, 128
        %s233 = scalar_lea.vmem [#allocation3], %s232
        %s234 = smul.u32 32, %s22
        %s235 = smul.u32 3, %s24
        %p236 = scmp.lt.s32.totalorder %s234, 63
        %s237 = scalar_select %p236, %s234, 63
        %p238 = scmp.lt.s32.totalorder %s235, 2
        %s239 = scalar_select %p238, %s235, 2
        %s240 = smul.addr %s237, 3
        %s241 = sadd.s32 %s239, %s240
        %s242 = smul.addr %s241, 4
        %s243 = scalar_lea.vmem %s0, %s242
        %s244 = smul.u32 32, %s22
        %s245 = smul.u32 3, %s24
        %s246 = smul.u32 36, %s24
        %p247 = scmp.lt.s32.totalorder %s246, 35
        %s248 = scalar_select %p247, %s246, 35
        %p249 = scmp.lt.s32.totalorder %s23, 0
        %s250 = scalar_select %p249, %s23, 0
        %s251 = sadd.s32 %s250, %s248
        %s252 = smul.addr %s251, 4
        %s253 = scalar_lea.vmem %s1, %s252
        %s254 = smul.u32 36, %s24
        %p255 = scmp.lt.s32.totalorder %s23, 0
        %s256 = scalar_select %p255, %s23, 0
        %s257 = scalar_lea.vmem %s2, %s256
        %s258 = smul.u32 32, %s22
        %p260 = scmp.eq.s32.totalorder %s24, 0
        // Predicated region
        $region33: #{tpu_custom_call.1} parent=31 // pred_check
          %p261 = pneg %p260
        $region34: #{tpu_custom_call.1} parent=31 // pred_check_branch
          %263 = sbr.rel (%p261) target = $region36
        $region35: #{tpu_custom_call.1} parent=31 // pred_region
          %264 = vst [vmem:[#allocation2] sm:$0xff] 0.0
          %265 = vst [vmem:[#allocation2 + $0x8] sm:$0xff] 0.0
          %266 = vst [vmem:[#allocation2 + $0x10] sm:$0xff] 0.0
          %267 = vst [vmem:[#allocation2 + $0x18] sm:$0xff] 0.0
          %268 = vst [vmem:[#allocation2 + $0x20] sm:$0xff] 0.0
          %269 = vst [vmem:[#allocation2 + $0x28] sm:$0xff] 0.0
          %270 = vst [vmem:[#allocation2 + $0x30] sm:$0xff] 0.0
          %271 = vst [vmem:[#allocation2 + $0x38] sm:$0xff] 0.0
          %272 = vst [vmem:[#allocation2 + $0x40] sm:$0xff] 0.0
          %273 = vst [vmem:[#allocation2 + $0x48] sm:$0xff] 0.0
          %274 = vst [vmem:[#allocation2 + $0x50] sm:$0xff] 0.0
          %275 = vst [vmem:[#allocation2 + $0x58] sm:$0xff] 0.0
          %276 = vst [vmem:[#allocation2 + $0x60] sm:$0xff] 0.0
          %277 = vst [vmem:[#allocation2 + $0x68] sm:$0xff] 0.0
          %278 = vst [vmem:[#allocation2 + $0x70] sm:$0xff] 0.0
          %279 = vst [vmem:[#allocation2 + $0x78] sm:$0xff] 0.0
          %280 = vst [vmem:[#allocation2 + $0x80] sm:$0xff] 0.0
          %281 = vst [vmem:[#allocation2 + $0x88] sm:$0xff] 0.0
          %282 = vst [vmem:[#allocation2 + $0x90] sm:$0xff] 0.0
          %283 = vst [vmem:[#allocation2 + $0x98] sm:$0xff] 0.0
          %284 = vst [vmem:[#allocation2 + $0xa0] sm:$0xff] 0.0
          %285 = vst [vmem:[#allocation2 + $0xa8] sm:$0xff] 0.0
          %286 = vst [vmem:[#allocation2 + $0xb0] sm:$0xff] 0.0
          %287 = vst [vmem:[#allocation2 + $0xb8] sm:$0xff] 0.0
          %288 = vst [vmem:[#allocation2 + $0xc0] sm:$0xff] 0.0
          %289 = vst [vmem:[#allocation2 + $0xc8] sm:$0xff] 0.0
          %290 = vst [vmem:[#allocation2 + $0xd0] sm:$0xff] 0.0
          %291 = vst [vmem:[#allocation2 + $0xd8] sm:$0xff] 0.0
          %292 = vst [vmem:[#allocation2 + $0xe0] sm:$0xff] 0.0
          %293 = vst [vmem:[#allocation2 + $0xe8] sm:$0xff] 0.0
          %294 = vst [vmem:[#allocation2 + $0xf0] sm:$0xff] 0.0
          %295 = vst [vmem:[#allocation2 + $0xf8] sm:$0xff] 0.0
        $region36: #{tpu_custom_call.1} parent=31 // pred_fallthru
          _
        %v296 = vld [vmem:[#allocation2] sm:$0xff]
        %v297 = vld [vmem:[#allocation2 + $0x8] sm:$0xff]
        %v298 = vld [vmem:[#allocation2 + $0x10] sm:$0xff]
        %v299 = vld [vmem:[#allocation2 + $0x18] sm:$0xff]
        %v300 = vld [vmem:[#allocation2 + $0x20] sm:$0xff]
        %v301 = vld [vmem:[#allocation2 + $0x28] sm:$0xff]
        %v302 = vld [vmem:[#allocation2 + $0x30] sm:$0xff]
        %v303 = vld [vmem:[#allocation2 + $0x38] sm:$0xff]
        %v304 = vld [vmem:[#allocation2 + $0x40] sm:$0xff]
        %v305 = vld [vmem:[#allocation2 + $0x48] sm:$0xff]
        %v306 = vld [vmem:[#allocation2 + $0x50] sm:$0xff]
        %v307 = vld [vmem:[#allocation2 + $0x58] sm:$0xff]
        %v308 = vld [vmem:[#allocation2 + $0x60] sm:$0xff]
        %v309 = vld [vmem:[#allocation2 + $0x68] sm:$0xff]
        %v310 = vld [vmem:[#allocation2 + $0x70] sm:$0xff]
        %v311 = vld [vmem:[#allocation2 + $0x78] sm:$0xff]
        %v312 = vld [vmem:[#allocation2 + $0x80] sm:$0xff]
        %v313 = vld [vmem:[#allocation2 + $0x88] sm:$0xff]
        %v314 = vld [vmem:[#allocation2 + $0x90] sm:$0xff]
        %v315 = vld [vmem:[#allocation2 + $0x98] sm:$0xff]
        %v316 = vld [vmem:[#allocation2 + $0xa0] sm:$0xff]
        %v317 = vld [vmem:[#allocation2 + $0xa8] sm:$0xff]
        %v318 = vld [vmem:[#allocation2 + $0xb0] sm:$0xff]
        %v319 = vld [vmem:[#allocation2 + $0xb8] sm:$0xff]
        %v320 = vld [vmem:[#allocation2 + $0xc0] sm:$0xff]
        %v321 = vld [vmem:[#allocation2 + $0xc8] sm:$0xff]
        %v322 = vld [vmem:[#allocation2 + $0xd0] sm:$0xff]
        %v323 = vld [vmem:[#allocation2 + $0xd8] sm:$0xff]
        %v324 = vld [vmem:[#allocation2 + $0xe0] sm:$0xff]
        %v325 = vld [vmem:[#allocation2 + $0xe8] sm:$0xff]
        %v326 = vld [vmem:[#allocation2 + $0xf0] sm:$0xff]
        %v327 = vld [vmem:[#allocation2 + $0xf8] sm:$0xff]
        %v328 = vld [vmem:[%s243] sm:$0xff]
        %v329 = vld [vmem:[%s243 + $0x8] sm:$0xf]
        %v330 = vld [vmem:[%s243 + $0xc] sm:$0xff]
        %v331 = vld [vmem:[%s243 + $0x14] sm:$0xf]
        %v332 = vld [vmem:[%s243 + $0x18] sm:$0xff]
        %v333 = vld [vmem:[%s243 + $0x20] sm:$0xf]
        %v334 = vld [vmem:[%s243 + $0x24] sm:$0xff]
        %v335 = vld [vmem:[%s243 + $0x2c] sm:$0xf]
        %v336 = vld [vmem:[%s243 + $0x30] sm:$0xff]
        %v337 = vld [vmem:[%s243 + $0x38] sm:$0xf]
        %v338 = vld [vmem:[%s243 + $0x3c] sm:$0xff]
        %v339 = vld [vmem:[%s243 + $0x44] sm:$0xf]
        %v340 = vld [vmem:[%s243 + $0x48] sm:$0xff]
        %v341 = vld [vmem:[%s243 + $0x50] sm:$0xf]
        %v342 = vld [vmem:[%s243 + $0x54] sm:$0xff]
        %v343 = vld [vmem:[%s243 + $0x5c] sm:$0xf]
        %v344 = vld [vmem:[%s243 + $0x60] sm:$0xff]
        %v345 = vld [vmem:[%s243 + $0x68] sm:$0xf]
        %v346 = vld [vmem:[%s243 + $0x6c] sm:$0xff]
        %v347 = vld [vmem:[%s243 + $0x74] sm:$0xf]
        %v348 = vld [vmem:[%s243 + $0x78] sm:$0xff]
        %v349 = vld [vmem:[%s243 + $0x80] sm:$0xf]
        %v350 = vld [vmem:[%s243 + $0x84] sm:$0xff]
        %v351 = vld [vmem:[%s243 + $0x8c] sm:$0xf]
        %v352 = vld [vmem:[%s243 + $0x90] sm:$0xff]
        %v353 = vld [vmem:[%s243 + $0x98] sm:$0xf]
        %v354 = vld [vmem:[%s243 + $0x9c] sm:$0xff]
        %v355 = vld [vmem:[%s243 + $0xa4] sm:$0xf]
        %v356 = vld [vmem:[%s243 + $0xa8] sm:$0xff]
        %v357 = vld [vmem:[%s243 + $0xb0] sm:$0xf]
        %v358 = vld [vmem:[%s243 + $0xb4] sm:$0xff]
        %v359 = vld [vmem:[%s243 + $0xbc] sm:$0xf]
        %v360 = vld [vmem:[%s243 + $0xc0] sm:$0xff]
        %v361 = vld [vmem:[%s243 + $0xc8] sm:$0xf]
        %v362 = vld [vmem:[%s243 + $0xcc] sm:$0xff]
        %v363 = vld [vmem:[%s243 + $0xd4] sm:$0xf]
        %v364 = vld [vmem:[%s243 + $0xd8] sm:$0xff]
        %v365 = vld [vmem:[%s243 + $0xe0] sm:$0xf]
        %v366 = vld [vmem:[%s243 + $0xe4] sm:$0xff]
        %v367 = vld [vmem:[%s243 + $0xec] sm:$0xf]
        %v368 = vld [vmem:[%s243 + $0xf0] sm:$0xff]
        %v369 = vld [vmem:[%s243 + $0xf8] sm:$0xf]
        %v370 = vld [vmem:[%s243 + $0xfc] sm:$0xff]
        %v371 = vld [vmem:[%s243 + $0x104] sm:$0xf]
        %v372 = vld [vmem:[%s243 + $0x108] sm:$0xff]
        %v373 = vld [vmem:[%s243 + $0x110] sm:$0xf]
        %v374 = vld [vmem:[%s243 + $0x114] sm:$0xff]
        %v375 = vld [vmem:[%s243 + $0x11c] sm:$0xf]
        %v376 = vld [vmem:[%s243 + $0x120] sm:$0xff]
        %v377 = vld [vmem:[%s243 + $0x128] sm:$0xf]
        %v378 = vld [vmem:[%s243 + $0x12c] sm:$0xff]
        %v379 = vld [vmem:[%s243 + $0x134] sm:$0xf]
        %v380 = vld [vmem:[%s243 + $0x138] sm:$0xff]
        %v381 = vld [vmem:[%s243 + $0x140] sm:$0xf]
        %v382 = vld [vmem:[%s243 + $0x144] sm:$0xff]
        %v383 = vld [vmem:[%s243 + $0x14c] sm:$0xf]
        %v384 = vld [vmem:[%s243 + $0x150] sm:$0xff]
        %v385 = vld [vmem:[%s243 + $0x158] sm:$0xf]
        %v386 = vld [vmem:[%s243 + $0x15c] sm:$0xff]
        %v387 = vld [vmem:[%s243 + $0x164] sm:$0xf]
        %v388 = vld [vmem:[%s243 + $0x168] sm:$0xff]
        %v389 = vld [vmem:[%s243 + $0x170] sm:$0xf]
        %v390 = vld [vmem:[%s243 + $0x174] sm:$0xff]
        %v391 = vld [vmem:[%s243 + $0x17c] sm:$0xf]
        %v392 = vld [vmem:[%s253] sm:$0xf]
        %v393 = vld [vmem:[%s253 + $0x4] sm:$0xf]
        %v394 = vld [vmem:[%s253 + $0x8] sm:$0xf]
        %v395 = vld [vmem:[%s253 + $0xc] sm:$0xf]
        %v396 = vld [vmem:[%s253 + $0x10] sm:$0xf]
        %v397 = vld [vmem:[%s253 + $0x14] sm:$0xf]
        %v398 = vld [vmem:[%s253 + $0x18] sm:$0xf]
        %v399 = vld [vmem:[%s253 + $0x1c] sm:$0xf]
        %v400 = vld [vmem:[%s253 + $0x20] sm:$0xf]
        %v401 = vld [vmem:[%s253 + $0x24] sm:$0xf]
        %v402 = vld [vmem:[%s253 + $0x28] sm:$0xf]
        %v403 = vld [vmem:[%s253 + $0x2c] sm:$0xf]
        %v404 = vld [vmem:[%s253 + $0x30] sm:$0xf]
        %v405 = vld [vmem:[%s253 + $0x34] sm:$0xf]
        %v406 = vld [vmem:[%s253 + $0x38] sm:$0xf]
        %v407 = vld [vmem:[%s253 + $0x3c] sm:$0xf]
        %v408 = vld [vmem:[%s253 + $0x40] sm:$0xf]
        %v409 = vld [vmem:[%s253 + $0x44] sm:$0xf]
        %v410 = vld [vmem:[%s253 + $0x48] sm:$0xf]
        %v411 = vld [vmem:[%s253 + $0x4c] sm:$0xf]
        %v412 = vld [vmem:[%s253 + $0x50] sm:$0xf]
        %v413 = vld [vmem:[%s253 + $0x54] sm:$0xf]
        %v414 = vld [vmem:[%s253 + $0x58] sm:$0xf]
        %v415 = vld [vmem:[%s253 + $0x5c] sm:$0xf]
        %v416 = vld [vmem:[%s253 + $0x60] sm:$0xf]
        %v417 = vld [vmem:[%s253 + $0x64] sm:$0xf]
        %v418 = vld [vmem:[%s253 + $0x68] sm:$0xf]
        %v419 = vld [vmem:[%s253 + $0x6c] sm:$0xf]
        %v420 = vld [vmem:[%s253 + $0x70] sm:$0xf]
        %v421 = vld [vmem:[%s253 + $0x74] sm:$0xf]
        %v422 = vld [vmem:[%s253 + $0x78] sm:$0xf]
        %v423 = vld [vmem:[%s253 + $0x7c] sm:$0xf]
        %v424 = vld [vmem:[%s253 + $0x80] sm:$0xf]
        %v425 = vld [vmem:[%s253 + $0x84] sm:$0xf]
        %v426 = vld [vmem:[%s253 + $0x88] sm:$0xf]
        %v427 = vld [vmem:[%s253 + $0x8c] sm:$0xf]
        %v492 = vunpack.c.l.b16 %v328
        %v493 = vunpack.c.h.b16 %v328
        %v494 = vunpack.c.l.b16 %v329
        %v495 = vunpack.c.l.b16 %v330
        %v496 = vunpack.c.h.b16 %v330
        %v497 = vunpack.c.l.b16 %v331
        %v498 = vunpack.c.l.b16 %v332
        %v499 = vunpack.c.h.b16 %v332
        %v500 = vunpack.c.l.b16 %v333
        %v501 = vunpack.c.l.b16 %v334
        %v502 = vunpack.c.h.b16 %v334
        %v503 = vunpack.c.l.b16 %v335
        %v504 = vunpack.c.l.b16 %v336
        %v505 = vunpack.c.h.b16 %v336
        %v506 = vunpack.c.l.b16 %v337
        %v507 = vunpack.c.l.b16 %v338
        %v508 = vunpack.c.h.b16 %v338
        %v509 = vunpack.c.l.b16 %v339
        %v510 = vunpack.c.l.b16 %v340
        %v511 = vunpack.c.h.b16 %v340
        %v512 = vunpack.c.l.b16 %v341
        %v513 = vunpack.c.l.b16 %v342
        %v514 = vunpack.c.h.b16 %v342
        %v515 = vunpack.c.l.b16 %v343
        %v516 = vunpack.c.l.b16 %v344
        %v517 = vunpack.c.h.b16 %v344
        %v518 = vunpack.c.l.b16 %v345
        %v519 = vunpack.c.l.b16 %v346
        %v520 = vunpack.c.h.b16 %v346
        %v521 = vunpack.c.l.b16 %v347
        %v522 = vunpack.c.l.b16 %v348
        %v523 = vunpack.c.h.b16 %v348
        %v524 = vunpack.c.l.b16 %v349
        %v525 = vunpack.c.l.b16 %v350
        %v526 = vunpack.c.h.b16 %v350
        %v527 = vunpack.c.l.b16 %v351
        %v528 = vunpack.c.l.b16 %v352
        %v529 = vunpack.c.h.b16 %v352
        %v530 = vunpack.c.l.b16 %v353
        %v531 = vunpack.c.l.b16 %v354
        %v532 = vunpack.c.h.b16 %v354
        %v533 = vunpack.c.l.b16 %v355
        %v534 = vunpack.c.l.b16 %v356
        %v535 = vunpack.c.h.b16 %v356
        %v536 = vunpack.c.l.b16 %v357
        %v537 = vunpack.c.l.b16 %v358
        %v538 = vunpack.c.h.b16 %v358
        %v539 = vunpack.c.l.b16 %v359
        %v540 = vunpack.c.l.b16 %v360
        %v541 = vunpack.c.h.b16 %v360
        %v542 = vunpack.c.l.b16 %v361
        %v543 = vunpack.c.l.b16 %v362
        %v544 = vunpack.c.h.b16 %v362
        %v545 = vunpack.c.l.b16 %v363
        %v546 = vunpack.c.l.b16 %v364
        %v547 = vunpack.c.h.b16 %v364
        %v548 = vunpack.c.l.b16 %v365
        %v549 = vunpack.c.l.b16 %v366
        %v550 = vunpack.c.h.b16 %v366
        %v551 = vunpack.c.l.b16 %v367
        %v552 = vunpack.c.l.b16 %v368
        %v553 = vunpack.c.h.b16 %v368
        %v554 = vunpack.c.l.b16 %v369
        %v555 = vunpack.c.l.b16 %v370
        %v556 = vunpack.c.h.b16 %v370
        %v557 = vunpack.c.l.b16 %v371
        %v558 = vunpack.c.l.b16 %v372
        %v559 = vunpack.c.h.b16 %v372
        %v560 = vunpack.c.l.b16 %v373
        %v561 = vunpack.c.l.b16 %v374
        %v562 = vunpack.c.h.b16 %v374
        %v563 = vunpack.c.l.b16 %v375
        %v564 = vunpack.c.l.b16 %v376
        %v565 = vunpack.c.h.b16 %v376
        %v566 = vunpack.c.l.b16 %v377
        %v567 = vunpack.c.l.b16 %v378
        %v568 = vunpack.c.h.b16 %v378
        %v569 = vunpack.c.l.b16 %v379
        %v570 = vunpack.c.l.b16 %v380
        %v571 = vunpack.c.h.b16 %v380
        %v572 = vunpack.c.l.b16 %v381
        %v573 = vunpack.c.l.b16 %v382
        %v574 = vunpack.c.h.b16 %v382
        %v575 = vunpack.c.l.b16 %v383
        %v576 = vunpack.c.l.b16 %v384
        %v577 = vunpack.c.h.b16 %v384
        %v578 = vunpack.c.l.b16 %v385
        %v579 = vunpack.c.l.b16 %v386
        %v580 = vunpack.c.h.b16 %v386
        %v581 = vunpack.c.l.b16 %v387
        %v582 = vunpack.c.l.b16 %v388
        %v583 = vunpack.c.h.b16 %v388
        %v584 = vunpack.c.l.b16 %v389
        %v585 = vunpack.c.l.b16 %v390
        %v586 = vunpack.c.h.b16 %v390
        %v587 = vunpack.c.l.b16 %v391
        %v588 = vpack.c.b16 %v495, %v492
        %v589 = vpack.c.b16 %v496, %v493
        %v590 = vpack.c.b16 %v497, %v494
        %v591 = vpack.c.b16 %v501, %v498
        %v592 = vpack.c.b16 %v502, %v499
        %v593 = vpack.c.b16 %v503, %v500
        %v594 = vpack.c.b16 %v507, %v504
        %v595 = vpack.c.b16 %v508, %v505
        %v596 = vpack.c.b16 %v509, %v506
        %v597 = vpack.c.b16 %v513, %v510
        %v598 = vpack.c.b16 %v514, %v511
        %v599 = vpack.c.b16 %v515, %v512
        %v600 = vpack.c.b16 %v519, %v516
        %v601 = vpack.c.b16 %v520, %v517
        %v602 = vpack.c.b16 %v521, %v518
        %v603 = vpack.c.b16 %v525, %v522
        %v604 = vpack.c.b16 %v526, %v523
        %v605 = vpack.c.b16 %v527, %v524
        %v606 = vpack.c.b16 %v531, %v528
        %v607 = vpack.c.b16 %v532, %v529
        %v608 = vpack.c.b16 %v533, %v530
        %v609 = vpack.c.b16 %v537, %v534
        %v610 = vpack.c.b16 %v538, %v535
        %v611 = vpack.c.b16 %v539, %v536
        %v612 = vpack.c.b16 %v543, %v540
        %v613 = vpack.c.b16 %v544, %v541
        %v614 = vpack.c.b16 %v545, %v542
        %v615 = vpack.c.b16 %v549, %v546
        %v616 = vpack.c.b16 %v550, %v547
        %v617 = vpack.c.b16 %v551, %v548
        %v618 = vpack.c.b16 %v555, %v552
        %v619 = vpack.c.b16 %v556, %v553
        %v620 = vpack.c.b16 %v557, %v554
        %v621 = vpack.c.b16 %v561, %v558
        %v622 = vpack.c.b16 %v562, %v559
        %v623 = vpack.c.b16 %v563, %v560
        %v624 = vpack.c.b16 %v567, %v564
        %v625 = vpack.c.b16 %v568, %v565
        %v626 = vpack.c.b16 %v569, %v566
        %v627 = vpack.c.b16 %v573, %v570
        %v628 = vpack.c.b16 %v574, %v571
        %v629 = vpack.c.b16 %v575, %v572
        %v630 = vpack.c.b16 %v579, %v576
        %v631 = vpack.c.b16 %v580, %v577
        %v632 = vpack.c.b16 %v581, %v578
        %v633 = vpack.c.b16 %v585, %v582
        %v634 = vpack.c.b16 %v586, %v583
        %v635 = vpack.c.b16 %v587, %v584
        %v704 = vunpack.c.l.b16 %v392
        %v705 = vunpack.c.l.b16 %v393
        %v706 = vunpack.c.l.b16 %v394
        %v707 = vunpack.c.l.b16 %v395
        %v708 = vunpack.c.l.b16 %v396
        %v709 = vunpack.c.l.b16 %v397
        %v710 = vunpack.c.l.b16 %v398
        %v711 = vunpack.c.l.b16 %v399
        %v712 = vunpack.c.l.b16 %v400
        %v713 = vunpack.c.l.b16 %v401
        %v714 = vunpack.c.l.b16 %v402
        %v715 = vunpack.c.l.b16 %v403
        %v716 = vunpack.c.l.b16 %v404
        %v717 = vunpack.c.l.b16 %v405
        %v718 = vunpack.c.l.b16 %v406
        %v719 = vunpack.c.l.b16 %v407
        %v720 = vunpack.c.l.b16 %v408
        %v721 = vunpack.c.l.b16 %v409
        %v722 = vunpack.c.l.b16 %v410
        %v723 = vunpack.c.l.b16 %v411
        %v724 = vunpack.c.l.b16 %v412
        %v725 = vunpack.c.l.b16 %v413
        %v726 = vunpack.c.l.b16 %v414
        %v727 = vunpack.c.l.b16 %v415
        %v728 = vunpack.c.l.b16 %v416
        %v729 = vunpack.c.l.b16 %v417
        %v730 = vunpack.c.l.b16 %v418
        %v731 = vunpack.c.l.b16 %v419
        %v732 = vunpack.c.l.b16 %v420
        %v733 = vunpack.c.l.b16 %v421
        %v734 = vunpack.c.l.b16 %v422
        %v735 = vunpack.c.l.b16 %v423
        %v736 = vunpack.c.l.b16 %v424
        %v737 = vunpack.c.l.b16 %v425
        %v738 = vunpack.c.l.b16 %v426
        %v739 = vunpack.c.l.b16 %v427
        %v740 = vpack.c.b16 %v705, %v704
        %v741 = vpack.c.b16 %v707, %v706
        %v742 = vpack.c.b16 %v709, %v708
        %v743 = vpack.c.b16 %v711, %v710
        %v744 = vpack.c.b16 %v713, %v712
        %v745 = vpack.c.b16 %v715, %v714
        %v746 = vpack.c.b16 %v717, %v716
        %v747 = vpack.c.b16 %v719, %v718
        %v748 = vpack.c.b16 %v721, %v720
        %v749 = vpack.c.b16 %v723, %v722
        %v750 = vpack.c.b16 %v725, %v724
        %v751 = vpack.c.b16 %v727, %v726
        %v752 = vpack.c.b16 %v729, %v728
        %v753 = vpack.c.b16 %v731, %v730
        %v754 = vpack.c.b16 %v733, %v732
        %v755 = vpack.c.b16 %v735, %v734
        %v756 = vpack.c.b16 %v737, %v736
        %v757 = vpack.c.b16 %v739, %v738
        %vm776 = vcmask 261120
        %v778 = vsel %vm776, %v590, 0
        %v781 = vsel %vm776, %v593, 0
        %v784 = vsel %vm776, %v596, 0
        %v787 = vsel %vm776, %v599, 0
        %v790 = vsel %vm776, %v602, 0
        %v793 = vsel %vm776, %v605, 0
        %v796 = vsel %vm776, %v608, 0
        %v799 = vsel %vm776, %v611, 0
        %v802 = vsel %vm776, %v614, 0
        %v805 = vsel %vm776, %v617, 0
        %v808 = vsel %vm776, %v620, 0
        %v811 = vsel %vm776, %v623, 0
        %v814 = vsel %vm776, %v626, 0
        %v817 = vsel %vm776, %v629, 0
        %v820 = vsel %vm776, %v632, 0
        %v823 = vsel %vm776, %v635, 0
        %825 = vmatpush.bf16.msra.mxu0 %v747
        %826 = vmatpush.bf16.msra.mxu0 %v746
        %827 = vmatpush.bf16.msra.mxu0 %v745
        %828 = vmatpush.bf16.msra.mxu0 %v744
        %829 = vmatpush.bf16.msra.mxu0 %v743
        %830 = vmatpush.bf16.msra.mxu0 %v742
        %831 = vmatpush.bf16.msra.mxu0 %v741
        %832 = vmatpush.bf16.msra.mxu0 %v740
        %833 = vmatmul.bf16.gmra.mxu0 %v588
        %v834 = vpop.f32.mrf.mxu0
        %v835 = vadd.f32 0.0, %v834
        %v836 = vpop.f32.mrf.mxu0
        %v837 = vadd.f32 0.0, %v836
        %838 = vmatmul.bf16.gmra.mxu0 %v591
        %v839 = vpop.f32.mrf.mxu0
        %v840 = vadd.f32 0.0, %v839
        %v841 = vpop.f32.mrf.mxu0
        %v842 = vadd.f32 0.0, %v841
        %843 = vmatmul.bf16.gmra.mxu0 %v594
        %v844 = vpop.f32.mrf.mxu0
        %v845 = vadd.f32 0.0, %v844
        %v846 = vpop.f32.mrf.mxu0
        %v847 = vadd.f32 0.0, %v846
        %848 = vmatmul.bf16.gmra.mxu0 %v597
        %v849 = vpop.f32.mrf.mxu0
        %v850 = vadd.f32 0.0, %v849
        %v851 = vpop.f32.mrf.mxu0
        %v852 = vadd.f32 0.0, %v851
        %853 = vmatmul.bf16.gmra.mxu0 %v600
        %v854 = vpop.f32.mrf.mxu0
        %v855 = vadd.f32 0.0, %v854
        %v856 = vpop.f32.mrf.mxu0
        %v857 = vadd.f32 0.0, %v856
        %858 = vmatmul.bf16.gmra.mxu0 %v603
        %v859 = vpop.f32.mrf.mxu0
        %v860 = vadd.f32 0.0, %v859
        %v861 = vpop.f32.mrf.mxu0
        %v862 = vadd.f32 0.0, %v861
        %863 = vmatmul.bf16.gmra.mxu0 %v606
        %v864 = vpop.f32.mrf.mxu0
        %v865 = vadd.f32 0.0, %v864
        %v866 = vpop.f32.mrf.mxu0
        %v867 = vadd.f32 0.0, %v866
        %868 = vmatmul.bf16.gmra.mxu0 %v609
        %v869 = vpop.f32.mrf.mxu0
        %v870 = vadd.f32 0.0, %v869
        %v871 = vpop.f32.mrf.mxu0
        %v872 = vadd.f32 0.0, %v871
        %873 = vmatmul.bf16.gmra.mxu0 %v612
        %v874 = vpop.f32.mrf.mxu0
        %v875 = vadd.f32 0.0, %v874
        %v876 = vpop.f32.mrf.mxu0
        %v877 = vadd.f32 0.0, %v876
        %878 = vmatmul.bf16.gmra.mxu0 %v615
        %v879 = vpop.f32.mrf.mxu0
        %v880 = vadd.f32 0.0, %v879
        %v881 = vpop.f32.mrf.mxu0
        %v882 = vadd.f32 0.0, %v881
        %883 = vmatmul.bf16.gmra.mxu0 %v618
        %v884 = vpop.f32.mrf.mxu0
        %v885 = vadd.f32 0.0, %v884
        %v886 = vpop.f32.mrf.mxu0
        %v887 = vadd.f32 0.0, %v886
        %888 = vmatmul.bf16.gmra.mxu0 %v621
        %v889 = vpop.f32.mrf.mxu0
        %v890 = vadd.f32 0.0, %v889
        %v891 = vpop.f32.mrf.mxu0
        %v892 = vadd.f32 0.0, %v891
        %893 = vmatmul.bf16.gmra.mxu0 %v624
        %v894 = vpop.f32.mrf.mxu0
        %v895 = vadd.f32 0.0, %v894
        %v896 = vpop.f32.mrf.mxu0
        %v897 = vadd.f32 0.0, %v896
        %898 = vmatmul.bf16.gmra.mxu0 %v627
        %v899 = vpop.f32.mrf.mxu0
        %v900 = vadd.f32 0.0, %v899
        %v901 = vpop.f32.mrf.mxu0
        %v902 = vadd.f32 0.0, %v901
        %903 = vmatmul.bf16.gmra.mxu0 %v630
        %v904 = vpop.f32.mrf.mxu0
        %v905 = vadd.f32 0.0, %v904
        %v906 = vpop.f32.mrf.mxu0
        %v907 = vadd.f32 0.0, %v906
        %908 = vmatmul.bf16.gmra.mxu0 %v633
        %v909 = vpop.f32.mrf.mxu0
        %v910 = vadd.f32 0.0, %v909
        %v911 = vpop.f32.mrf.mxu0
        %v912 = vadd.f32 0.0, %v911
        %913 = vdwg.mxu0
        %914 = vmatpush.bf16.msra.mxu0 %v755
        %915 = vmatpush.bf16.msra.mxu0 %v754
        %916 = vmatpush.bf16.msra.mxu0 %v753
        %917 = vmatpush.bf16.msra.mxu0 %v752
        %918 = vmatpush.bf16.msra.mxu0 %v751
        %919 = vmatpush.bf16.msra.mxu0 %v750
        %920 = vmatpush.bf16.msra.mxu0 %v749
        %921 = vmatpush.bf16.msra.mxu0 %v748
        %922 = vmatmul.bf16.gmra.mxu0 %v589
        %v923 = vpop.f32.mrf.mxu0
        %v924 = vadd.f32 %v835, %v923
        %v925 = vpop.f32.mrf.mxu0
        %v926 = vadd.f32 %v837, %v925
        %927 = vmatmul.bf16.gmra.mxu0 %v592
        %v928 = vpop.f32.mrf.mxu0
        %v929 = vadd.f32 %v840, %v928
        %v930 = vpop.f32.mrf.mxu0
        %v931 = vadd.f32 %v842, %v930
        %932 = vmatmul.bf16.gmra.mxu0 %v595
        %v933 = vpop.f32.mrf.mxu0
        %v934 = vadd.f32 %v845, %v933
        %v935 = vpop.f32.mrf.mxu0
        %v936 = vadd.f32 %v847, %v935
        %937 = vmatmul.bf16.gmra.mxu0 %v598
        %v938 = vpop.f32.mrf.mxu0
        %v939 = vadd.f32 %v850, %v938
        %v940 = vpop.f32.mrf.mxu0
        %v941 = vadd.f32 %v852, %v940
        %942 = vmatmul.bf16.gmra.mxu0 %v601
        %v943 = vpop.f32.mrf.mxu0
        %v944 = vadd.f32 %v855, %v943
        %v945 = vpop.f32.mrf.mxu0
        %v946 = vadd.f32 %v857, %v945
        %947 = vmatmul.bf16.gmra.mxu0 %v604
        %v948 = vpop.f32.mrf.mxu0
        %v949 = vadd.f32 %v860, %v948
        %v950 = vpop.f32.mrf.mxu0
        %v951 = vadd.f32 %v862, %v950
        %952 = vmatmul.bf16.gmra.mxu0 %v607
        %v953 = vpop.f32.mrf.mxu0
        %v954 = vadd.f32 %v865, %v953
        %v955 = vpop.f32.mrf.mxu0
        %v956 = vadd.f32 %v867, %v955
        %957 = vmatmul.bf16.gmra.mxu0 %v610
        %v958 = vpop.f32.mrf.mxu0
        %v959 = vadd.f32 %v870, %v958
        %v960 = vpop.f32.mrf.mxu0
        %v961 = vadd.f32 %v872, %v960
        %962 = vmatmul.bf16.gmra.mxu0 %v613
        %v963 = vpop.f32.mrf.mxu0
        %v964 = vadd.f32 %v875, %v963
        %v965 = vpop.f32.mrf.mxu0
        %v966 = vadd.f32 %v877, %v965
        %967 = vmatmul.bf16.gmra.mxu0 %v616
        %v968 = vpop.f32.mrf.mxu0
        %v969 = vadd.f32 %v880, %v968
        %v970 = vpop.f32.mrf.mxu0
        %v971 = vadd.f32 %v882, %v970
        %972 = vmatmul.bf16.gmra.mxu0 %v619
        %v973 = vpop.f32.mrf.mxu0
        %v974 = vadd.f32 %v885, %v973
        %v975 = vpop.f32.mrf.mxu0
        %v976 = vadd.f32 %v887, %v975
        %977 = vmatmul.bf16.gmra.mxu0 %v622
        %v978 = vpop.f32.mrf.mxu0
        %v979 = vadd.f32 %v890, %v978
        %v980 = vpop.f32.mrf.mxu0
        %v981 = vadd.f32 %v892, %v980
        %982 = vmatmul.bf16.gmra.mxu0 %v625
        %v983 = vpop.f32.mrf.mxu0
        %v984 = vadd.f32 %v895, %v983
        %v985 = vpop.f32.mrf.mxu0
        %v986 = vadd.f32 %v897, %v985
        %987 = vmatmul.bf16.gmra.mxu0 %v628
        %v988 = vpop.f32.mrf.mxu0
        %v989 = vadd.f32 %v900, %v988
        %v990 = vpop.f32.mrf.mxu0
        %v991 = vadd.f32 %v902, %v990
        %992 = vmatmul.bf16.gmra.mxu0 %v631
        %v993 = vpop.f32.mrf.mxu0
        %v994 = vadd.f32 %v905, %v993
        %v995 = vpop.f32.mrf.mxu0
        %v996 = vadd.f32 %v907, %v995
        %997 = vmatmul.bf16.gmra.mxu0 %v634
        %v998 = vpop.f32.mrf.mxu0
        %v999 = vadd.f32 %v910, %v998
        %v1000 = vpop.f32.mrf.mxu0
        %v1001 = vadd.f32 %v912, %v1000
        %1002 = vdwg.mxu0
        %1003 = vmatpush.bf16.msra.mxu0 0
        %1004 = vmatpush.bf16.msra.mxu0 0
        %1005 = vmatpush.bf16.msra.mxu0 0
        %1006 = vmatpush.bf16.msra.mxu0 0
        %1007 = vmatpush.bf16.msra.mxu0 0
        %1008 = vmatpush.bf16.msra.mxu0 0
        %1009 = vmatpush.bf16.msra.mxu0 %v757
        %1010 = vmatpush.bf16.msra.mxu0 %v756
        %1011 = vmatmul.bf16.gmra.mxu0 %v778
        %v1012 = vpop.f32.mrf.mxu0
        %v1013 = vadd.f32 %v924, %v1012
        %v1014 = vpop.f32.mrf.mxu0
        %v1015 = vadd.f32 %v926, %v1014
        %1016 = vmatmul.bf16.gmra.mxu0 %v781
        %v1017 = vpop.f32.mrf.mxu0
        %v1018 = vadd.f32 %v929, %v1017
        %v1019 = vpop.f32.mrf.mxu0
        %v1020 = vadd.f32 %v931, %v1019
        %1021 = vmatmul.bf16.gmra.mxu0 %v784
        %v1022 = vpop.f32.mrf.mxu0
        %v1023 = vadd.f32 %v934, %v1022
        %v1024 = vpop.f32.mrf.mxu0
        %v1025 = vadd.f32 %v936, %v1024
        %1026 = vmatmul.bf16.gmra.mxu0 %v787
        %v1027 = vpop.f32.mrf.mxu0
        %v1028 = vadd.f32 %v939, %v1027
        %v1029 = vpop.f32.mrf.mxu0
        %v1030 = vadd.f32 %v941, %v1029
        %1031 = vmatmul.bf16.gmra.mxu0 %v790
        %v1032 = vpop.f32.mrf.mxu0
        %v1033 = vadd.f32 %v944, %v1032
        %v1034 = vpop.f32.mrf.mxu0
        %v1035 = vadd.f32 %v946, %v1034
        %1036 = vmatmul.bf16.gmra.mxu0 %v793
        %v1037 = vpop.f32.mrf.mxu0
        %v1038 = vadd.f32 %v949, %v1037
        %v1039 = vpop.f32.mrf.mxu0
        %v1040 = vadd.f32 %v951, %v1039
        %1041 = vmatmul.bf16.gmra.mxu0 %v796
        %v1042 = vpop.f32.mrf.mxu0
        %v1043 = vadd.f32 %v954, %v1042
        %v1044 = vpop.f32.mrf.mxu0
        %v1045 = vadd.f32 %v956, %v1044
        %1046 = vmatmul.bf16.gmra.mxu0 %v799
        %v1047 = vpop.f32.mrf.mxu0
        %v1048 = vadd.f32 %v959, %v1047
        %v1049 = vpop.f32.mrf.mxu0
        %v1050 = vadd.f32 %v961, %v1049
        %1051 = vmatmul.bf16.gmra.mxu0 %v802
        %v1052 = vpop.f32.mrf.mxu0
        %v1053 = vadd.f32 %v964, %v1052
        %v1054 = vpop.f32.mrf.mxu0
        %v1055 = vadd.f32 %v966, %v1054
        %1056 = vmatmul.bf16.gmra.mxu0 %v805
        %v1057 = vpop.f32.mrf.mxu0
        %v1058 = vadd.f32 %v969, %v1057
        %v1059 = vpop.f32.mrf.mxu0
        %v1060 = vadd.f32 %v971, %v1059
        %1061 = vmatmul.bf16.gmra.mxu0 %v808
        %v1062 = vpop.f32.mrf.mxu0
        %v1063 = vadd.f32 %v974, %v1062
        %v1064 = vpop.f32.mrf.mxu0
        %v1065 = vadd.f32 %v976, %v1064
        %1066 = vmatmul.bf16.gmra.mxu0 %v811
        %v1067 = vpop.f32.mrf.mxu0
        %v1068 = vadd.f32 %v979, %v1067
        %v1069 = vpop.f32.mrf.mxu0
        %v1070 = vadd.f32 %v981, %v1069
        %1071 = vmatmul.bf16.gmra.mxu0 %v814
        %v1072 = vpop.f32.mrf.mxu0
        %v1073 = vadd.f32 %v984, %v1072
        %v1074 = vpop.f32.mrf.mxu0
        %v1075 = vadd.f32 %v986, %v1074
        %1076 = vmatmul.bf16.gmra.mxu0 %v817
        %v1077 = vpop.f32.mrf.mxu0
        %v1078 = vadd.f32 %v989, %v1077
        %v1079 = vpop.f32.mrf.mxu0
        %v1080 = vadd.f32 %v991, %v1079
        %1081 = vmatmul.bf16.gmra.mxu0 %v820
        %v1082 = vpop.f32.mrf.mxu0
        %v1083 = vadd.f32 %v994, %v1082
        %v1084 = vpop.f32.mrf.mxu0
        %v1085 = vadd.f32 %v996, %v1084
        %1086 = vmatmul.bf16.gmra.mxu0 %v823
        %v1087 = vpop.f32.mrf.mxu0
        %v1088 = vadd.f32 %v999, %v1087
        %v1089 = vpop.f32.mrf.mxu0
        %v1090 = vadd.f32 %v1001, %v1089
        %1091 = vdwg.mxu0
        %v1092 = vadd.f32 %v296, %v1013
        %v1093 = vadd.f32 %v297, %v1015
        %v1094 = vadd.f32 %v298, %v1018
        %v1095 = vadd.f32 %v299, %v1020
        %v1096 = vadd.f32 %v300, %v1023
        %v1097 = vadd.f32 %v301, %v1025
        %v1098 = vadd.f32 %v302, %v1028
        %v1099 = vadd.f32 %v303, %v1030
        %v1100 = vadd.f32 %v304, %v1033
        %v1101 = vadd.f32 %v305, %v1035
        %v1102 = vadd.f32 %v306, %v1038
        %v1103 = vadd.f32 %v307, %v1040
        %v1104 = vadd.f32 %v308, %v1043
        %v1105 = vadd.f32 %v309, %v1045
        %v1106 = vadd.f32 %v310, %v1048
        %v1107 = vadd.f32 %v311, %v1050
        %v1108 = vadd.f32 %v312, %v1053
        %v1109 = vadd.f32 %v313, %v1055
        %v1110 = vadd.f32 %v314, %v1058
        %v1111 = vadd.f32 %v315, %v1060
        %v1112 = vadd.f32 %v316, %v1063
        %v1113 = vadd.f32 %v317, %v1065
        %v1114 = vadd.f32 %v318, %v1068
        %v1115 = vadd.f32 %v319, %v1070
        %v1116 = vadd.f32 %v320, %v1073
        %v1117 = vadd.f32 %v321, %v1075
        %v1118 = vadd.f32 %v322, %v1078
        %v1119 = vadd.f32 %v323, %v1080
        %v1120 = vadd.f32 %v324, %v1083
        %v1121 = vadd.f32 %v325, %v1085
        %v1122 = vadd.f32 %v326, %v1088
        %v1123 = vadd.f32 %v327, %v1090
        %1124 = vst [vmem:[#allocation2] sm:$0xff] %v1092
        %1125 = vst [vmem:[#allocation2 + $0x8] sm:$0xff] %v1093
        %1126 = vst [vmem:[#allocation2 + $0x10] sm:$0xff] %v1094
        %1127 = vst [vmem:[#allocation2 + $0x18] sm:$0xff] %v1095
        %1128 = vst [vmem:[#allocation2 + $0x20] sm:$0xff] %v1096
        %1129 = vst [vmem:[#allocation2 + $0x28] sm:$0xff] %v1097
        %1130 = vst [vmem:[#allocation2 + $0x30] sm:$0xff] %v1098
        %1131 = vst [vmem:[#allocation2 + $0x38] sm:$0xff] %v1099
        %1132 = vst [vmem:[#allocation2 + $0x40] sm:$0xff] %v1100
        %1133 = vst [vmem:[#allocation2 + $0x48] sm:$0xff] %v1101
        %1134 = vst [vmem:[#allocation2 + $0x50] sm:$0xff] %v1102
        %1135 = vst [vmem:[#allocation2 + $0x58] sm:$0xff] %v1103
        %1136 = vst [vmem:[#allocation2 + $0x60] sm:$0xff] %v1104
        %1137 = vst [vmem:[#allocation2 + $0x68] sm:$0xff] %v1105
        %1138 = vst [vmem:[#allocation2 + $0x70] sm:$0xff] %v1106
        %1139 = vst [vmem:[#allocation2 + $0x78] sm:$0xff] %v1107
        %1140 = vst [vmem:[#allocation2 + $0x80] sm:$0xff] %v1108
        %1141 = vst [vmem:[#allocation2 + $0x88] sm:$0xff] %v1109
        %1142 = vst [vmem:[#allocation2 + $0x90] sm:$0xff] %v1110
        %1143 = vst [vmem:[#allocation2 + $0x98] sm:$0xff] %v1111
        %1144 = vst [vmem:[#allocation2 + $0xa0] sm:$0xff] %v1112
        %1145 = vst [vmem:[#allocation2 + $0xa8] sm:$0xff] %v1113
        %1146 = vst [vmem:[#allocation2 + $0xb0] sm:$0xff] %v1114
        %1147 = vst [vmem:[#allocation2 + $0xb8] sm:$0xff] %v1115
        %1148 = vst [vmem:[#allocation2 + $0xc0] sm:$0xff] %v1116
        %1149 = vst [vmem:[#allocation2 + $0xc8] sm:$0xff] %v1117
        %1150 = vst [vmem:[#allocation2 + $0xd0] sm:$0xff] %v1118
        %1151 = vst [vmem:[#allocation2 + $0xd8] sm:$0xff] %v1119
        %1152 = vst [vmem:[#allocation2 + $0xe0] sm:$0xff] %v1120
        %1153 = vst [vmem:[#allocation2 + $0xe8] sm:$0xff] %v1121
        %1154 = vst [vmem:[#allocation2 + $0xf0] sm:$0xff] %v1122
        %1155 = vst [vmem:[#allocation2 + $0xf8] sm:$0xff] %v1123
        // Predicated region
        $region37: #{tpu_custom_call.1} parent=31 // pred_check
          %p1156 = pneg %p260
        $region38: #{tpu_custom_call.1} parent=31 // pred_check_branch
          %1158 = sbr.rel (%p1156) target = $region40
        $region39: #{tpu_custom_call.1} parent=31 // pred_region
          %v1159 = vld [vmem:[#allocation2] sm:$0xff]
          %v1160 = vld [vmem:[#allocation2 + $0x8] sm:$0xff]
          %v1161 = vld [vmem:[#allocation2 + $0x10] sm:$0xff]
          %v1162 = vld [vmem:[#allocation2 + $0x18] sm:$0xff]
          %v1163 = vld [vmem:[#allocation2 + $0x20] sm:$0xff]
          %v1164 = vld [vmem:[#allocation2 + $0x28] sm:$0xff]
          %v1165 = vld [vmem:[#allocation2 + $0x30] sm:$0xff]
          %v1166 = vld [vmem:[#allocation2 + $0x38] sm:$0xff]
          %v1167 = vld [vmem:[#allocation2 + $0x40] sm:$0xff]
          %v1168 = vld [vmem:[#allocation2 + $0x48] sm:$0xff]
          %v1169 = vld [vmem:[#allocation2 + $0x50] sm:$0xff]
          %v1170 = vld [vmem:[#allocation2 + $0x58] sm:$0xff]
          %v1171 = vld [vmem:[#allocation2 + $0x60] sm:$0xff]
          %v1172 = vld [vmem:[#allocation2 + $0x68] sm:$0xff]
          %v1173 = vld [vmem:[#allocation2 + $0x70] sm:$0xff]
          %v1174 = vld [vmem:[#allocation2 + $0x78] sm:$0xff]
          %v1175 = vld [vmem:[#allocation2 + $0x80] sm:$0xff]
          %v1176 = vld [vmem:[#allocation2 + $0x88] sm:$0xff]
          %v1177 = vld [vmem:[#allocation2 + $0x90] sm:$0xff]
          %v1178 = vld [vmem:[#allocation2 + $0x98] sm:$0xff]
          %v1179 = vld [vmem:[#allocation2 + $0xa0] sm:$0xff]
          %v1180 = vld [vmem:[#allocation2 + $0xa8] sm:$0xff]
          %v1181 = vld [vmem:[#allocation2 + $0xb0] sm:$0xff]
          %v1182 = vld [vmem:[#allocation2 + $0xb8] sm:$0xff]
          %v1183 = vld [vmem:[#allocation2 + $0xc0] sm:$0xff]
          %v1184 = vld [vmem:[#allocation2 + $0xc8] sm:$0xff]
          %v1185 = vld [vmem:[#allocation2 + $0xd0] sm:$0xff]
          %v1186 = vld [vmem:[#allocation2 + $0xd8] sm:$0xff]
          %v1187 = vld [vmem:[#allocation2 + $0xe0] sm:$0xff]
          %v1188 = vld [vmem:[#allocation2 + $0xe8] sm:$0xff]
          %v1189 = vld [vmem:[#allocation2 + $0xf0] sm:$0xff]
          %v1190 = vld [vmem:[#allocation2 + $0xf8] sm:$0xff]
          %v1191 = vld [vmem:[%s257] sm:$0x1]
          %v1193 = vperm.slane %v1191, 0
          %v1195 = vadd.f32 %v1159, %v1193
          %v1196 = vadd.f32 %v1160, %v1193
          %v1197 = vadd.f32 %v1161, %v1193
          %v1198 = vadd.f32 %v1162, %v1193
          %v1199 = vadd.f32 %v1163, %v1193
          %v1200 = vadd.f32 %v1164, %v1193
          %v1201 = vadd.f32 %v1165, %v1193
          %v1202 = vadd.f32 %v1166, %v1193
          %v1203 = vadd.f32 %v1167, %v1193
          %v1204 = vadd.f32 %v1168, %v1193
          %v1205 = vadd.f32 %v1169, %v1193
          %v1206 = vadd.f32 %v1170, %v1193
          %v1207 = vadd.f32 %v1171, %v1193
          %v1208 = vadd.f32 %v1172, %v1193
          %v1209 = vadd.f32 %v1173, %v1193
          %v1210 = vadd.f32 %v1174, %v1193
          %v1211 = vadd.f32 %v1175, %v1193
          %v1212 = vadd.f32 %v1176, %v1193
          %v1213 = vadd.f32 %v1177, %v1193
          %v1214 = vadd.f32 %v1178, %v1193
          %v1215 = vadd.f32 %v1179, %v1193
          %v1216 = vadd.f32 %v1180, %v1193
          %v1217 = vadd.f32 %v1181, %v1193
          %v1218 = vadd.f32 %v1182, %v1193
          %v1219 = vadd.f32 %v1183, %v1193
          %v1220 = vadd.f32 %v1184, %v1193
          %v1221 = vadd.f32 %v1185, %v1193
          %v1222 = vadd.f32 %v1186, %v1193
          %v1223 = vadd.f32 %v1187, %v1193
          %v1224 = vadd.f32 %v1188, %v1193
          %v1225 = vadd.f32 %v1189, %v1193
          %v1226 = vadd.f32 %v1190, %v1193
          %v1227 = vpack.c.bf16 %v1195, %v1195
          %v1228 = vpack.c.bf16 %v1196, %v1196
          %v1229 = vpack.c.bf16 %v1197, %v1197
          %v1230 = vpack.c.bf16 %v1198, %v1198
          %v1231 = vpack.c.bf16 %v1199, %v1199
          %v1232 = vpack.c.bf16 %v1200, %v1200
          %v1233 = vpack.c.bf16 %v1201, %v1201
          %v1234 = vpack.c.bf16 %v1202, %v1202
          %v1235 = vpack.c.bf16 %v1203, %v1203
          %v1236 = vpack.c.bf16 %v1204, %v1204
          %v1237 = vpack.c.bf16 %v1205, %v1205
          %v1238 = vpack.c.bf16 %v1206, %v1206
          %v1239 = vpack.c.bf16 %v1207, %v1207
          %v1240 = vpack.c.bf16 %v1208, %v1208
          %v1241 = vpack.c.bf16 %v1209, %v1209
          %v1242 = vpack.c.bf16 %v1210, %v1210
          %v1243 = vpack.c.bf16 %v1211, %v1211
          %v1244 = vpack.c.bf16 %v1212, %v1212
          %v1245 = vpack.c.bf16 %v1213, %v1213
          %v1246 = vpack.c.bf16 %v1214, %v1214
          %v1247 = vpack.c.bf16 %v1215, %v1215
          %v1248 = vpack.c.bf16 %v1216, %v1216
          %v1249 = vpack.c.bf16 %v1217, %v1217
          %v1250 = vpack.c.bf16 %v1218, %v1218
          %v1251 = vpack.c.bf16 %v1219, %v1219
          %v1252 = vpack.c.bf16 %v1220, %v1220
          %v1253 = vpack.c.bf16 %v1221, %v1221
          %v1254 = vpack.c.bf16 %v1222, %v1222
          %v1255 = vpack.c.bf16 %v1223, %v1223
          %v1256 = vpack.c.bf16 %v1224, %v1224
          %v1257 = vpack.c.bf16 %v1225, %v1225
          %v1258 = vpack.c.bf16 %v1226, %v1226
          %1259 = vst [vmem:[%s233] sm:$0xf] %v1227
          %1260 = vst [vmem:[%s233 + $0x4] sm:$0xf] %v1228
          %1261 = vst [vmem:[%s233 + $0x8] sm:$0xf] %v1229
          %1262 = vst [vmem:[%s233 + $0xc] sm:$0xf] %v1230
          %1263 = vst [vmem:[%s233 + $0x10] sm:$0xf] %v1231
          %1264 = vst [vmem:[%s233 + $0x14] sm:$0xf] %v1232
          %1265 = vst [vmem:[%s233 + $0x18] sm:$0xf] %v1233
          %1266 = vst [vmem:[%s233 + $0x1c] sm:$0xf] %v1234
          %1267 = vst [vmem:[%s233 + $0x20] sm:$0xf] %v1235
          %1268 = vst [vmem:[%s233 + $0x24] sm:$0xf] %v1236
          %1269 = vst [vmem:[%s233 + $0x28] sm:$0xf] %v1237
          %1270 = vst [vmem:[%s233 + $0x2c] sm:$0xf] %v1238
          %1271 = vst [vmem:[%s233 + $0x30] sm:$0xf] %v1239
          %1272 = vst [vmem:[%s233 + $0x34] sm:$0xf] %v1240
          %1273 = vst [vmem:[%s233 + $0x38] sm:$0xf] %v1241
          %1274 = vst [vmem:[%s233 + $0x3c] sm:$0xf] %v1242
          %1275 = vst [vmem:[%s233 + $0x40] sm:$0xf] %v1243
          %1276 = vst [vmem:[%s233 + $0x44] sm:$0xf] %v1244
          %1277 = vst [vmem:[%s233 + $0x48] sm:$0xf] %v1245
          %1278 = vst [vmem:[%s233 + $0x4c] sm:$0xf] %v1246
          %1279 = vst [vmem:[%s233 + $0x50] sm:$0xf] %v1247
          %1280 = vst [vmem:[%s233 + $0x54] sm:$0xf] %v1248
          %1281 = vst [vmem:[%s233 + $0x58] sm:$0xf] %v1249
          %1282 = vst [vmem:[%s233 + $0x5c] sm:$0xf] %v1250
          %1283 = vst [vmem:[%s233 + $0x60] sm:$0xf] %v1251
          %1284 = vst [vmem:[%s233 + $0x64] sm:$0xf] %v1252
          %1285 = vst [vmem:[%s233 + $0x68] sm:$0xf] %v1253
          %1286 = vst [vmem:[%s233 + $0x6c] sm:$0xf] %v1254
          %1287 = vst [vmem:[%s233 + $0x70] sm:$0xf] %v1255
          %1288 = vst [vmem:[%s233 + $0x74] sm:$0xf] %v1256
          %1289 = vst [vmem:[%s233 + $0x78] sm:$0xf] %v1257
          %1290 = vst [vmem:[%s233 + $0x7c] sm:$0xf] %v1258
        $region40: #{tpu_custom_call.1} parent=31 // pred_fallthru
          _
        %s1291 = sand.u32 %s128, 1
        %s1292 = scalar_lea.sflag [#allocation4], %s1291
        %s1293 = sand.u32 %s128, 1
        %s1294 = smul.addr %s1293, 128
        %s1295 = scalar_lea.vmem [#allocation3], %s1294
        // Predicated region
        $region41: #{tpu_custom_call.1} parent=31 // pred_check
          %p1296 = pneg %p138
        $region42: #{tpu_custom_call.1} parent=31 // pred_check_branch
          %1298 = sbr.rel (%p1296) target = $region44
        $region43: #{tpu_custom_call.1} parent=31 // pred_region
          %s1299 = smul.u32 32, %s22
          %1301 = vsyncadd %s1292, 0
          %s1302 = sadd.s32 %s23, %s1299
          %s1303 = smul.addr %s1302, 4
          %s1304 = scalar_lea.hbm %s3, %s1303
          %s1305 = sshll.u32 %s1295, 4
          %s1306 = int_to_ptr.vmem [resolvable:$true] %s1305
          %s1307 = sshll.u32 %s1304, 4
          %s1308 = int_to_ptr.hbm [resolvable:$true] %s1307
          %1313 = dma.vmem_to_hbm [thread:$0]  %s1306, 2048, %s1308, %s1292, 64, 64, 4
        $region44: #{tpu_custom_call.1} parent=31 // pred_fallthru
          _
      $region32: #{tpu_custom_call.1} parent=5 // pred_fallthru
        _
      %p1314 = scmp.le.s32.totalorder 2, %s12
      // Predicated region
      $region45: #{tpu_custom_call.1} parent=5 // pred_check
        %p1315 = pneg %p1314
      $region46: #{tpu_custom_call.1} parent=5 // pred_check_branch
        %1317 = sbr.rel (%p1315) target = $region48
      $region47: #{tpu_custom_call.1} parent=5 // pred_region
        %s1318 = ssub.s32 %s12, 2
        // Predicated region
        $region49: #{tpu_custom_call.1} parent=47 // pred_check
          %p1319 = pneg %p144
        $region50: #{tpu_custom_call.1} parent=47 // pred_check_branch
          %1321 = sbr.rel (%p1319) target = $region52
        $region51: #{tpu_custom_call.1} parent=47 // pred_region
          %s1322 = sand.u32 %s129, 1
          %s1323 = scalar_lea.sflag [#allocation4], %s1322
          %s1324 = sand.u32 %s129, 1
          %s1325 = smul.addr %s1324, 128
          %s1326 = scalar_lea.vmem [#allocation3], %s1325
          %1328 = dma.done %s1323, 2048
        $region52: #{tpu_custom_call.1} parent=47 // pred_fallthru
          _
      $region48: #{tpu_custom_call.1} parent=5 // pred_fallthru
        _
    $region6: #{tpu_custom_call.1} parent=1 // loop_footer
      %s16 = sadd.s32 1, %s12
    $region7: #{tpu_custom_call.1} parent=1 // loop_footer_branch
      %11 = sbr.rel target = $region3
    $region8: #{tpu_custom_call.1} parent=1 // loop_exit
      _
    %1329 = vsyncpa [#allocation4], 1
    %s1330 = scalar_lea.sflag [#allocation4], 1
    %1331 = vsyncpa %s1330, 1

</llo_original>
